<compile_context>
chip_gen: v6e
topology: v6e:2x2x1
jax: 0.10.0
libtpu: 0.0.40
codegen_flags: <defaults>
</compile_context>

<pallas_src>
import jax
import jax.numpy as jnp
from jax.experimental import pallas as pl
from jax.experimental.pallas import tpu as pltpu


def _round_up(x: int, m: int) -> int:
    return (x + m - 1) // m * m


def _vmem_block_bytes(rows: int, cols: int, itemsize: int) -> int:
    # VMEM layout pads the trailing two dims to (8, 128) tiles.
    return _round_up(max(rows, 1), 8) * _round_up(max(cols, 1), 128) * itemsize


def _vmem_need_bytes(tb, tn, d_in, xi, wi, bi, oi, w_bufs) -> int:
    need = (2 * _vmem_block_bytes(tb, d_in, xi)           # x (double-buffered)
            + w_bufs * _vmem_block_bytes(d_in, tn, wi)    # weight strip
            + w_bufs * _vmem_block_bytes(1, tn, bi)       # bias strip
            + 2 * _vmem_block_bytes(tb, tn, oi)           # out (double-buffered)
            + _vmem_block_bytes(tb, tn, 4))               # f32 dot/bias/relu temp
    return int(need * 1.2)                                # ~20% headroom


def _projector_kernel(x_ref, w_ref, b_ref, o_ref):
    """One (batch-tile, out-tile) block of relu(x @ W + b)."""
    y = jnp.dot(x_ref[...], w_ref[...], preferred_element_type=jnp.float32)
    y = y + b_ref[...].astype(jnp.float32)                # (1, tn) broadcast
    o_ref[...] = jnp.maximum(y, 0.0).astype(o_ref.dtype)


def modality_projector(x, w, b, *, tile_b=None, tile_n=None):
    """relu(x @ w + b) as one fused Pallas TPU kernel.

    Args:
      x: (..., D_in) activations.
      w: (D_in, D_out) weight (i.e. torch `fc.weight` transposed).
      b: (D_out,) bias.
      tile_b: batch rows per grid step (default: auto, up to 1024).
      tile_n: output columns per grid step (default: auto -> whole D_out
              whenever the (D_in, D_out) weight strip fits VMEM).

    Returns:
      (..., D_out) array with dtype = result_type(x, w).
    """
    orig_shape = x.shape
    D_in = orig_shape[-1]
    x2 = x.reshape(-1, D_in)
    B = x2.shape[0]
    D_out = w.shape[1]
    out_dtype = jnp.result_type(x.dtype, w.dtype)

    xi = jnp.dtype(x.dtype).itemsize
    wi = jnp.dtype(w.dtype).itemsize
    bi = jnp.dtype(b.dtype).itemsize
    oi = jnp.dtype(out_dtype).itemsize

    # --- generation-aware VMEM budget ---------------------------------------
    try:
        phys_vmem = int(getattr(pltpu.get_tpu_info(), "vmem_capacity_bytes",
                                64 << 20))
    except Exception:
        phys_vmem = 64 << 20                         # conservative (v7x-sized)
    vmem_limit = int(min(phys_vmem * 0.85, 112 << 20))   # ~108 MiB v5e/v6e, ~54 MiB v7x
    budget = int(vmem_limit * 0.8)                   # extra tiling headroom

    # --- tile_n: keep num_n == 1 (x streamed exactly once) whenever possible --
    if tile_n is None or tile_n >= D_out:
        tn = D_out                                   # full dim -> exempt from 128 rule
    else:
        tn = max(128, _round_up(int(tile_n), 128))
    while tn > 128 and _vmem_need_bytes(8, tn, D_in, xi, wi, bi, oi, 2) > budget:
        tn = max(128, _round_up((tn + 1) // 2, 128))
    num_n = pl.cdiv(D_out, tn)
    w_bufs = 1 if num_n == 1 else 2

    # --- tile_b: as large as the budget allows (per-step overhead ~0.35 us) ---
    desired_b = 1024 if tile_b is None else max(8, int(tile_b))
    if desired_b >= B:
        tb = B                                       # full dim -> exempt from 8-row rule
    else:
        tb = max(8, desired_b // 8 * 8)
    while tb > 8 and _vmem_need_bytes(tb, tn, D_in, xi, wi, bi, oi, w_bufs) > budget:
        nxt = max(8, (tb // 2) // 8 * 8)
        if nxt == tb:
            break
        tb = nxt
    num_b = pl.cdiv(B, tb)

    b2d = b.reshape(1, D_out)

    # Cost estimate uses true (unpadded) element counts.
    cost = pl.CostEstimate(
        flops=2 * B * D_in * D_out + B * D_out,
        transcendentals=0,
        bytes_accessed=(B * D_in * xi + D_in * D_out * wi + D_out * bi
                        + B * D_out * oi),
    )

    def _build(single_buffer_w: bool):
        wspec_kwargs = (dict(pipeline_mode=pl.Buffered(1))
                        if single_buffer_w else {})
        if num_n == 1:
            # Fold the N axis away: batch is the sole (megacore-shardable)
            # parallel axis; W and bias blocks never change.
            grid = (num_b,)
            in_specs = [
                pl.BlockSpec((tb, D_in), lambda i: (i, 0)),
                pl.BlockSpec((D_in, tn), lambda i: (0, 0), **wspec_kwargs),
                pl.BlockSpec((1, tn), lambda i: (0, 0), **wspec_kwargs),
            ]
            out_specs = pl.BlockSpec((tb, tn), lambda i: (i, 0))
            dims = ("parallel",)
        else:
            # N outer, batch inner: each weight strip is fetched once while x
            # streams under it.
            grid = (num_n, num_b)
            in_specs = [
                pl.BlockSpec((tb, D_in), lambda j, i: (i, 0)),
                pl.BlockSpec((D_in, tn), lambda j, i: (0, j)),
                pl.BlockSpec((1, tn), lambda j, i: (0, j)),
            ]
            out_specs = pl.BlockSpec((tb, tn), lambda j, i: (i, j))
            dims = ("parallel", "parallel")
        return pl.pallas_call(
            _projector_kernel,
            out_shape=jax.ShapeDtypeStruct((B, D_out), out_dtype),
            grid_spec=pltpu.PrefetchScalarGridSpec(
                num_scalar_prefetch=0,
                grid=grid,
                in_specs=in_specs,
                out_specs=out_specs,
            ),
            compiler_params=pltpu.CompilerParams(
                dimension_semantics=dims,
                vmem_limit_bytes=int(vmem_limit),
            ),
            cost_estimate=cost,
        )

    if num_n == 1:
        # Single-buffer the never-changing weight/bias blocks (saves a full W
        # copy of VMEM, material on v7x); fall back to default double-buffering
        # if this toolchain rejects pipeline_mode / Buffered(1).
        try:
            out = _build(True)(x2, w, b2d)
        except Exception:
            out = _build(False)(x2, w, b2d)
    else:
        out = _build(False)(x2, w, b2d)

    return out.reshape(*orig_shape[:-1], D_out)


if __name__ == "__main__":
    # Small, deliberately unaligned shapes: K=48 (no padding, full-dim block),
    # D_out=96 (<128, full-dim masked-lane output block), batch=300 with
    # tile_b=128 -> a real 3-step grid whose last block is a masked boundary.
    batch, in_dim, out_dim = 300, 48, 96

    key = jax.random.PRNGKey(0)
    kx, kw, kb = jax.random.split(key, 3)

    x = jax.random.normal(kx, (batch, in_dim), dtype=jnp.float32)
    bound = float(1.0 / (in_dim ** 0.5))
    # w is torch's fc.weight transposed: (in_dim, out_dim).
    w = jax.random.uniform(kw, (in_dim, out_dim), jnp.float32, -bound, bound)
    b = jax.random.uniform(kb, (out_dim,), jnp.float32, -bound, bound)

    out = modality_projector(x, w, b, tile_b=128)
    out = jax.block_until_ready(out)

    ref = jnp.maximum(x @ w + b, 0.0)
    assert out.shape == (batch, out_dim)
    assert jnp.allclose(out, ref, atol=5e-4, rtol=5e-4), "mismatch vs reference"

    print("KERNEL_OK")
</pallas_src>

<mosaic_0001>
module attributes {stable_mosaic.version = 11 : i64} {
  func.func @_projector_kernel(%arg0: i32, %arg1: memref<128x48xf32, #tpu.memory_space<vmem>>, %arg2: memref<48x96xf32, #tpu.memory_space<vmem>>, %arg3: memref<1x96xf32, #tpu.memory_space<vmem>>, %arg4: memref<128x96xf32, #tpu.memory_space<vmem>>) attributes {dimension_semantics = [#tpu.dimension_semantics<parallel>], iteration_bounds = array<i64: 3>, scalar_prefetch = 0 : i64, scratch_operands = 0 : i64, tpu.core_type = #tpu.core_type<tc>, window_params = [{transform_indices = @transform_0, window_bounds = array<i64: 128, 48>}, {pipeline_mode = #tpu.pipeline_mode<synchronous>, transform_indices = @transform_1, window_bounds = array<i64: 48, 96>}, {pipeline_mode = #tpu.pipeline_mode<synchronous>, transform_indices = @transform_2, window_bounds = array<i64: 1, 96>}, {transform_indices = @transform_3, window_bounds = array<i64: 128, 96>}]} {
    %c0 = arith.constant 0 : index
    %c0_0 = arith.constant 0 : index
    %0 = vector.load %arg1[%c0, %c0_0] : memref<128x48xf32, #tpu.memory_space<vmem>>, vector<128x48xf32>
    %c0_1 = arith.constant 0 : index
    %c0_2 = arith.constant 0 : index
    %1 = vector.load %arg2[%c0_1, %c0_2] : memref<48x96xf32, #tpu.memory_space<vmem>>, vector<48x96xf32>
    %cst = arith.constant dense<0.000000e+00> : vector<128x96xf32>
    %2 = tpu.matmul %0, %1, %cst {dimension_numbers = #tpu.dot_dimension_numbers<[1], [0], [0], [1], [0, 0, 1, 1], [], []>} : vector<128x48xf32>, vector<48x96xf32>, vector<128x96xf32> -> vector<128x96xf32>
    %c0_3 = arith.constant 0 : index
    %c0_4 = arith.constant 0 : index
    %3 = vector.load %arg3[%c0_3, %c0_4] : memref<1x96xf32, #tpu.memory_space<vmem>>, vector<1x96xf32>
    %4 = vector.broadcast %3 : vector<1x96xf32> to vector<128x96xf32>
    %5 = arith.addf %2, %4 : vector<128x96xf32>
    %cst_5 = arith.constant 0.000000e+00 : f32
    %6 = vector.broadcast %cst_5 : f32 to vector<128x96xf32>
    %7 = arith.maximumf %5, %6 : vector<128x96xf32>
    %c0_6 = arith.constant 0 : index
    %c0_7 = arith.constant 0 : index
    %8 = vector.load %arg4[%c0_6, %c0_7] : memref<128x96xf32, #tpu.memory_space<vmem>>, vector<128x96xf32>
    tpu.vector_store %arg4[%c0_6, %c0_7], %7 {strides = array<i32>} : memref<128x96xf32, #tpu.memory_space<vmem>>, vector<128x96xf32>,
    return
  }
  func.func @transform_0(%arg0: i32) -> (i32, i32) {
    %c0_i32 = arith.constant 0 : i32
    %c0_i32_0 = arith.constant 0 : i32
    return %arg0, %c0_i32 : i32, i32
  }
  func.func @transform_1(%arg0: i32) -> (i32, i32) {
    %c0_i32 = arith.constant 0 : i32
    %c0_i32_0 = arith.constant 0 : i32
    %c0_i32_1 = arith.constant 0 : i32
    return %c0_i32, %c0_i32_0 : i32, i32
  }
  func.func @transform_2(%arg0: i32) -> (i32, i32) {
    %c0_i32 = arith.constant 0 : i32
    %c0_i32_0 = arith.constant 0 : i32
    %c0_i32_1 = arith.constant 0 : i32
    return %c0_i32, %c0_i32_0 : i32, i32
  }
  func.func @transform_3(%arg0: i32) -> (i32, i32) {
    %c0_i32 = arith.constant 0 : i32
    %c0_i32_0 = arith.constant 0 : i32
    return %arg0, %c0_i32 : i32, i32
  }
}

module attributes {stable_mosaic.version = 11 : i64} {
  func.func @_projector_kernel(%arg0: i32, %arg1: memref<128x48xf32, #tpu.memory_space<vmem>>, %arg2: memref<48x96xf32, #tpu.memory_space<vmem>>, %arg3: memref<1x96xf32, #tpu.memory_space<vmem>>, %arg4: memref<128x96xf32, #tpu.memory_space<vmem>>) attributes {dimension_semantics = [#tpu.dimension_semantics<parallel>], iteration_bounds = array<i64: 3>, scalar_prefetch = 0 : i64, scratch_operands = 0 : i64, tpu.core_type = #tpu.core_type<tc>, window_params = [{transform_indices = @transform_0, window_bounds = array<i64: 128, 48>}, {pipeline_mode = #tpu.pipeline_mode<synchronous>, transform_indices = @transform_1, window_bounds = array<i64: 48, 96>}, {pipeline_mode = #tpu.pipeline_mode<synchronous>, transform_indices = @transform_2, window_bounds = array<i64: 1, 96>}, {transform_indices = @transform_3, window_bounds = array<i64: 128, 96>}]} {
    %c0 = arith.constant 0 : index
    %c0_0 = arith.constant 0 : index
    %0 = vector.load %arg1[%c0, %c0_0] : memref<128x48xf32, #tpu.memory_space<vmem>>, vector<128x48xf32>
    %c0_1 = arith.constant 0 : index
    %c0_2 = arith.constant 0 : index
    %1 = vector.load %arg2[%c0_1, %c0_2] : memref<48x96xf32, #tpu.memory_space<vmem>>, vector<48x96xf32>
    %cst = arith.constant dense<0.000000e+00> : vector<128x96xf32>
    %2 = tpu.matmul %0, %1, %cst {dimension_numbers = #tpu.dot_dimension_numbers<[1], [0], [0], [1], [0, 0, 1, 1], [], []>} : vector<128x48xf32>, vector<48x96xf32>, vector<128x96xf32> -> vector<128x96xf32>
    %c0_3 = arith.constant 0 : index
    %c0_4 = arith.constant 0 : index
    %3 = vector.load %arg3[%c0_3, %c0_4] : memref<1x96xf32, #tpu.memory_space<vmem>>, vector<1x96xf32>
    %4 = vector.broadcast %3 : vector<1x96xf32> to vector<128x96xf32>
    %5 = arith.addf %2, %4 : vector<128x96xf32>
    %cst_5 = arith.constant 0.000000e+00 : f32
    %6 = vector.broadcast %cst_5 : f32 to vector<128x96xf32>
    %7 = arith.maximumf %5, %6 : vector<128x96xf32>
    %c0_6 = arith.constant 0 : index
    %c0_7 = arith.constant 0 : index
    %8 = vector.load %arg4[%c0_6, %c0_7] : memref<128x96xf32, #tpu.memory_space<vmem>>, vector<128x96xf32>
    tpu.vector_store %arg4[%c0_6, %c0_7], %7 {strides = array<i32>} : memref<128x96xf32, #tpu.memory_space<vmem>>, vector<128x96xf32>,
    return
  }
  func.func @transform_0(%arg0: i32) -> (i32, i32) {
    %c0_i32 = arith.constant 0 : i32
    %c0_i32_0 = arith.constant 0 : i32
    return %arg0, %c0_i32 : i32, i32
  }
  func.func @transform_1(%arg0: i32) -> (i32, i32) {
    %c0_i32 = arith.constant 0 : i32
    %c0_i32_0 = arith.constant 0 : i32
    %c0_i32_1 = arith.constant 0 : i32
    return %c0_i32, %c0_i32_0 : i32, i32
  }
  func.func @transform_2(%arg0: i32) -> (i32, i32) {
    %c0_i32 = arith.constant 0 : i32
    %c0_i32_0 = arith.constant 0 : i32
    %c0_i32_1 = arith.constant 0 : i32
    return %c0_i32, %c0_i32_0 : i32, i32
  }
  func.func @transform_3(%arg0: i32) -> (i32, i32) {
    %c0_i32 = arith.constant 0 : i32
    %c0_i32_0 = arith.constant 0 : i32
    return %arg0, %c0_i32 : i32, i32
  }
}

</mosaic_0001>

<llo_original>
// kernel: tpu_custom_call.1
$region0: #{tpu_custom_call.1}
  #allocation0 [shape = 'u32[]', space=smem, size = 0x4, offset = 0x4, fixed_abs, tag = 'smem constant byte address 0x4 - core index']
  #allocation1 [shape = 'u32[144,128]{1,0:T(1,128)}', space=vmem, size = 0x12000, scoped, tag = 'internal scratch']
  %s0 = inlined_call_operand.vmem [shape: f32[300,48], index: 0, kind: input, shape index: {}]
  %s1 = inlined_call_operand.vmem [shape: f32[48,96], index: 1, kind: input, shape index: {}]
  %s2 = inlined_call_operand.vmem [shape: f32[1,96], index: 2, kind: input, shape index: {}]
  %s3 = inlined_call_operand.vmem [shape: f32[300,96], index: 3, kind: output, shape index: {}]
  %s4 = sld [smem:[#allocation0]]
  $region93: #{tpu_custom_call.1} parent=0
    _
  %s6 = ssub.s32 1, %s4
  %s7 = scalar_select 0, %s6, %s4
  $region1: #{tpu_custom_call.1} parent=0
    #allocation2 [shape = 'u8[131072]{0}', space=vmem, size = 0x20000, scoped, tag = 'output window, operand 0']
    loop: start=0, step=1, limit=5
    $region2: #{tpu_custom_call.1} parent=1 // loop_pre_header
      _
    $region3: #{tpu_custom_call.1} parent=1 // loop_header
      %s9 = sphi 0, %s13
      %p10 = scmp.ge.s32.totalorder %s9, 5
      %s19 = sphi 0, %s21
      %s22 = sphi 0, %s19
      %s23 = sphi 0, %s22
      %s39 = sphi 0, %s23
      %s43 = sphi 0, %s43
      %s45 = sphi 0, %s43
      %s46 = sphi 0, %s45
      %s60 = sphi 0, %s46
      %s64 = sphi 0, %s64
      %s66 = sphi 0, %s64
      %s67 = sphi 0, %s66
      %s81 = sphi 0, %s67
      %s87 = sphi 0, %s89
      %s90 = sphi 0, %s87
      %s91 = sphi 0, %s90
      %s107 = sphi 0, %s91
    $region4: #{tpu_custom_call.1} parent=1 // loop_header_branch
      %12 = sbr.rel (%p10) target = $region8
    $region5: #{tpu_custom_call.1} parent=1 // loop_body
      %s14 = ssub.s32 %s9, 1
      %s15 = ssub.s32 %s9, 2
      %s16 = sadd.s32 %s9, 1
      %s17 = ssub.s32 %s9, %s16
      %p18 = scmp.eq.s32.totalorder %s17, 0
      %s20 = sadd.s32 %s19, 1
      %s21 = scalar_select %p18, %s19, %s20
      %p24 = pneg %p18
      %p25 = scmp.eq.s32.totalorder %s9, 2
      %p26 = por %p24, %p25
      %p27 = scmp.ne.s32.totalorder %s19, %s22
      %p28 = scmp.eq.s32.totalorder %s9, 0
      %p29 = por %p27, %p28
      %p30 = scmp.ne.s32.totalorder %s19, %s22
      %p31 = scmp.eq.s32.totalorder %s14, 2
      %p32 = por %p30, %p31
      %p33 = scmp.ne.s32.totalorder %s22, %s23
      %p34 = scmp.eq.s32.totalorder %s14, 0
      %p35 = por %p33, %p34
      %p36 = scmp.ne.s32.totalorder %s22, %s23
      %p37 = scmp.eq.s32.totalorder %s15, 2
      %p38 = por %p36, %p37
      %p40 = scmp.ne.s32.totalorder %s23, %s39
      %p41 = scmp.eq.s32.totalorder %s15, 0
      %p42 = por %p40, %p41
      %s44 = sadd.s32 %s43, 1
      %p47 = scmp.eq.s32.totalorder %s9, 2
      %p48 = scmp.ne.s32.totalorder %s43, %s45
      %p49 = scmp.eq.s32.totalorder %s9, 0
      %p50 = por %p48, %p49
      %p51 = scmp.ne.s32.totalorder %s43, %s45
      %p52 = scmp.eq.s32.totalorder %s14, 2
      %p53 = por %p51, %p52
      %p54 = scmp.ne.s32.totalorder %s45, %s46
      %p55 = scmp.eq.s32.totalorder %s14, 0
      %p56 = por %p54, %p55
      %p57 = scmp.ne.s32.totalorder %s45, %s46
      %p58 = scmp.eq.s32.totalorder %s15, 2
      %p59 = por %p57, %p58
      %p61 = scmp.ne.s32.totalorder %s46, %s60
      %p62 = scmp.eq.s32.totalorder %s15, 0
      %p63 = por %p61, %p62
      %s65 = sadd.s32 %s64, 1
      %p68 = scmp.eq.s32.totalorder %s9, 2
      %p69 = scmp.ne.s32.totalorder %s64, %s66
      %p70 = scmp.eq.s32.totalorder %s9, 0
      %p71 = por %p69, %p70
      %p72 = scmp.ne.s32.totalorder %s64, %s66
      %p73 = scmp.eq.s32.totalorder %s14, 2
      %p74 = por %p72, %p73
      %p75 = scmp.ne.s32.totalorder %s66, %s67
      %p76 = scmp.eq.s32.totalorder %s14, 0
      %p77 = por %p75, %p76
      %p78 = scmp.ne.s32.totalorder %s66, %s67
      %p79 = scmp.eq.s32.totalorder %s15, 2
      %p80 = por %p78, %p79
      %p82 = scmp.ne.s32.totalorder %s67, %s81
      %p83 = scmp.eq.s32.totalorder %s15, 0
      %p84 = por %p82, %p83
      %s85 = ssub.s32 %s9, %s16
      %p86 = scmp.eq.s32.totalorder %s85, 0
      %s88 = sadd.s32 %s87, 1
      %s89 = scalar_select %p86, %s87, %s88
      %p92 = pneg %p86
      %p93 = scmp.eq.s32.totalorder %s9, 2
      %p94 = por %p92, %p93
      %p95 = scmp.ne.s32.totalorder %s87, %s90
      %p96 = scmp.eq.s32.totalorder %s9, 0
      %p97 = por %p95, %p96
      %p98 = scmp.ne.s32.totalorder %s87, %s90
      %p99 = scmp.eq.s32.totalorder %s14, 2
      %p100 = por %p98, %p99
      %p101 = scmp.ne.s32.totalorder %s90, %s91
      %p102 = scmp.eq.s32.totalorder %s14, 0
      %p103 = por %p101, %p102
      %p104 = scmp.ne.s32.totalorder %s90, %s91
      %p105 = scmp.eq.s32.totalorder %s15, 2
      %p106 = por %p104, %p105
      %p108 = scmp.ne.s32.totalorder %s91, %s107
      %p109 = scmp.eq.s32.totalorder %s15, 0
      %p110 = por %p108, %p109
      %p111 = scmp.le.s32.totalorder 1, %s9
      %p112 = scmp.lt.s32.totalorder %s9, 4
      %p113 = pnand %p111, %p112
      %p114 = pneg %p113
      // Predicated region
      $region9: #{tpu_custom_call.1} parent=5 // pred_check
        _
      $region10: #{tpu_custom_call.1} parent=5 // pred_check_branch
        %116 = sbr.rel (%p113) target = $region12
      $region11: #{tpu_custom_call.1} parent=5 // pred_region
        %s117 = ssub.s32 %s9, 1
        // Predicated region
        $region13: #{tpu_custom_call.1} parent=11 // pred_check
          %p118 = pneg %p56
        $region14: #{tpu_custom_call.1} parent=11 // pred_check_branch
          %120 = sbr.rel (%p118) target = $region16
        $region15: #{tpu_custom_call.1} parent=11 // pred_region
          _
        $region16: #{tpu_custom_call.1} parent=11 // pred_fallthru
          _
        // Predicated region
        $region17: #{tpu_custom_call.1} parent=11 // pred_check
          %p121 = pneg %p77
        $region18: #{tpu_custom_call.1} parent=11 // pred_check_branch
          %123 = sbr.rel (%p121) target = $region20
        $region19: #{tpu_custom_call.1} parent=11 // pred_region
          _
        $region20: #{tpu_custom_call.1} parent=11 // pred_fallthru
          _
      $region12: #{tpu_custom_call.1} parent=5 // pred_fallthru
        _
      %p124 = scmp.lt.s32.totalorder %s9, 3
      // Predicated region
      $region21: #{tpu_custom_call.1} parent=5 // pred_check
        %p125 = pneg %p124
      $region22: #{tpu_custom_call.1} parent=5 // pred_check_branch
        %127 = sbr.rel (%p125) target = $region24
      $region23: #{tpu_custom_call.1} parent=5 // pred_region
        // Predicated region
        $region25: #{tpu_custom_call.1} parent=23 // pred_check
          %p128 = pneg %p29
        $region26: #{tpu_custom_call.1} parent=23 // pred_check_branch
          %130 = sbr.rel (%p128) target = $region28
        $region27: #{tpu_custom_call.1} parent=23 // pred_region
          %s131 = smul.u32 16, %s9
          %s132 = ssub.s32 38, %s131
          %p133 = scmp.lt.s32.totalorder %s132, 16
          %s134 = scalar_select %p133, %s132, 16
          %s135 = smul.u32 128, %s134
          %p136 = scmp.lt.s32.totalorder %s131, 37
          %s137 = scalar_select %p136, %s131, 37
          %s138 = smul.addr %s137, 8
          %s139 = scalar_lea.vmem %s0, %s138
          %s140 = smul.u32 16, %s9
          %s141 = ssub.s32 38, %s140
          %p142 = scmp.lt.s32.totalorder %s141, 16
          %s143 = scalar_select %p142, %s141, 16
          %s144 = smul.u32 128, %s143
        $region28: #{tpu_custom_call.1} parent=23 // pred_fallthru
          _
      $region24: #{tpu_custom_call.1} parent=5 // pred_fallthru
        _
      %p145 = scmp.le.s32.totalorder 1, %s9
      %p146 = scmp.lt.s32.totalorder %s9, 4
      %p147 = pnand %p145, %p146
      %p148 = pneg %p147
      // Predicated region
      $region29: #{tpu_custom_call.1} parent=5 // pred_check
        _
      $region30: #{tpu_custom_call.1} parent=5 // pred_check_branch
        %150 = sbr.rel (%p147) target = $region32
      $region31: #{tpu_custom_call.1} parent=5 // pred_region
        %s151 = ssub.s32 %s9, 1
        %s152 = smul.u32 16, %s14
        %s153 = ssub.s32 38, %s152
        %p154 = scmp.lt.s32.totalorder %s153, 16
        %s155 = scalar_select %p154, %s153, 16
        %s156 = smul.u32 128, %s155
        %p157 = scmp.lt.s32.totalorder %s152, 37
        %s158 = scalar_select %p157, %s152, 37
        %s159 = smul.addr %s158, 8
        %s160 = scalar_lea.vmem %s0, %s159
        %p161 = pneg %p35
        %p162 = pneg %p32
        %p163 = pneg %p56
        %p164 = pneg %p53
        %p165 = pneg %p77
        %p166 = pneg %p74
        %p167 = pneg %p103
        %p168 = pneg %p100
        %s169 = sand.u32 %s90, 1
        %s170 = sand.u32 %s90, 1
        %s171 = smul.addr %s170, 128
        %s172 = scalar_lea.vmem [#allocation2], %s171
        %s173 = smul.u32 16, %s14
        %s174 = ssub.s32 38, %s173
        %p175 = scmp.lt.s32.totalorder %s174, 16
        %s176 = scalar_select %p175, %s174, 16
        %s177 = smul.u32 128, %s176
        %p178 = scmp.lt.s32.totalorder %s173, 37
        %s179 = scalar_select %p178, %s173, 37
        %s180 = smul.addr %s179, 8
        %s181 = scalar_lea.vmem %s0, %s180
        %s182 = smul.u32 16, %s14
        %s183 = ssub.s32 38, %s182
        %p184 = scmp.lt.s32.totalorder %s183, 16
        %s185 = scalar_select %p184, %s183, 16
        %s186 = smul.u32 128, %s185
        %s187 = smul.u32 16, %s14
        %s188 = ssub.s32 38, %s187
        %p189 = scmp.lt.s32.totalorder %s188, 16
        %s190 = scalar_select %p189, %s188, 16
        %s191 = smul.u32 128, %s190
        %v192 = vld [vmem:[%s181] sm:$0xff]
        %v193 = vld [vmem:[%s181 + $0x8] sm:$0xff]
        %v194 = vld [vmem:[%s181 + $0x10] sm:$0xff]
        %v195 = vld [vmem:[%s181 + $0x18] sm:$0xff]
        %v196 = vld [vmem:[%s181 + $0x20] sm:$0xff]
        %v197 = vld [vmem:[%s181 + $0x28] sm:$0xff]
        %v198 = vld [vmem:[%s181 + $0x30] sm:$0xff]
        %v199 = vld [vmem:[%s181 + $0x38] sm:$0xff]
        %v200 = vld [vmem:[%s181 + $0x40] sm:$0xff]
        %v201 = vld [vmem:[%s181 + $0x48] sm:$0xff]
        %v202 = vld [vmem:[%s181 + $0x50] sm:$0xff]
        %v203 = vld [vmem:[%s181 + $0x58] sm:$0xff]
        %v204 = vld [vmem:[%s181 + $0x60] sm:$0xff]
        %v205 = vld [vmem:[%s181 + $0x68] sm:$0xff]
        %v206 = vld [vmem:[%s181 + $0x70] sm:$0xff]
        %v207 = vld [vmem:[%s181 + $0x78] sm:$0xff]
        %v208 = vld [vmem:[%s1] sm:$0xff]
        %v209 = vld [vmem:[%s1 + $0x8] sm:$0xff]
        %v210 = vld [vmem:[%s1 + $0x10] sm:$0xff]
        %v211 = vld [vmem:[%s1 + $0x18] sm:$0xff]
        %v212 = vld [vmem:[%s1 + $0x20] sm:$0xff]
        %v213 = vld [vmem:[%s1 + $0x28] sm:$0xff]
        %v214 = vld [vmem:[%s2] sm:$0x1]
        %v216 = vlaneseq
        %v217 = vshrl.u32 %v216, 7
        %v218 = vsub.s32 0, %v217
        %v219 = vrot.slane %v214, %v218
        %vm221 = vcmask 392192
        %v223 = vsel %vm221, %v192, 0
        %v226 = vsel %vm221, %v193, 0
        %v229 = vsel %vm221, %v194, 0
        %v232 = vsel %vm221, %v195, 0
        %v235 = vsel %vm221, %v196, 0
        %v238 = vsel %vm221, %v197, 0
        %v241 = vsel %vm221, %v198, 0
        %v244 = vsel %vm221, %v199, 0
        %v247 = vsel %vm221, %v200, 0
        %v250 = vsel %vm221, %v201, 0
        %v253 = vsel %vm221, %v202, 0
        %v256 = vsel %vm221, %v203, 0
        %v259 = vsel %vm221, %v204, 0
        %v262 = vsel %vm221, %v205, 0
        %v265 = vsel %vm221, %v206, 0
        %v268 = vsel %vm221, %v207, 0
        %270 = vmatprep.subr.mxu0 0.0
        %271 = vmatpush1.msra.mxu0 0.0
        %272 = vmatprep.subr.mxu0 0.0
        %273 = vmatpush1.msra.mxu0 0.0
        %274 = vmatprep.subr.mxu0 0.0
        %275 = vmatpush1.msra.mxu0 0.0
        %276 = vmatprep.subr.mxu0 0.0
        %277 = vmatpush1.msra.mxu0 0.0
        %278 = vmatprep.subr.mxu0 0.0
        %279 = vmatpush1.msra.mxu0 0.0
        %280 = vmatprep.subr.mxu0 0.0
        %281 = vmatpush1.msra.mxu0 0.0
        %282 = vmatprep.subr.mxu0 0.0
        %283 = vmatpush1.msra.mxu0 0.0
        %284 = vmatprep.subr.mxu0 0.0
        %285 = vmatpush1.msra.mxu0 0.0
        %286 = vmatprep.subr.mxu0 0.0
        %287 = vmatpush1.msra.mxu0 0.0
        %288 = vmatprep.subr.mxu0 0.0
        %289 = vmatpush1.msra.mxu0 0.0
        %290 = vmatprep.subr.mxu0 0.0
        %291 = vmatpush1.msra.mxu0 %v213
        %292 = vmatprep.subr.mxu0 0.0
        %293 = vmatpush1.msra.mxu0 %v212
        %294 = vmatprep.subr.mxu0 0.0
        %295 = vmatpush1.msra.mxu0 %v211
        %296 = vmatprep.subr.mxu0 0.0
        %297 = vmatpush1.msra.mxu0 %v210
        %298 = vmatprep.subr.mxu0 0.0
        %299 = vmatpush1.msra.mxu0 %v209
        %300 = vmatprep.subr.mxu0 0.0
        %301 = vmatpush1.msra.mxu0 %v208
        %302 = vmatprep.subr.mxu0 0.0
        %303 = vmatpush2.msra.mxu0 0.0
        %304 = vmatprep.subr.mxu0 0.0
        %305 = vmatpush2.msra.mxu0 0.0
        %306 = vmatprep.subr.mxu0 0.0
        %307 = vmatpush2.msra.mxu0 0.0
        %308 = vmatprep.subr.mxu0 0.0
        %309 = vmatpush2.msra.mxu0 0.0
        %310 = vmatprep.subr.mxu0 0.0
        %311 = vmatpush2.msra.mxu0 0.0
        %312 = vmatprep.subr.mxu0 0.0
        %313 = vmatpush2.msra.mxu0 0.0
        %314 = vmatprep.subr.mxu0 0.0
        %315 = vmatpush2.msra.mxu0 0.0
        %316 = vmatprep.subr.mxu0 0.0
        %317 = vmatpush2.msra.mxu0 0.0
        %318 = vmatprep.subr.mxu0 0.0
        %319 = vmatpush2.msra.mxu0 0.0
        %320 = vmatprep.subr.mxu0 0.0
        %321 = vmatpush2.msra.mxu0 0.0
        %322 = vmatprep.subr.mxu0 0.0
        %323 = vmatpush2.msra.mxu0 0.0
        %324 = vmatprep.subr.mxu0 0.0
        %325 = vmatpush2.msra.mxu0 0.0
        %326 = vmatprep.subr.mxu0 0.0
        %327 = vmatpush2.msra.mxu0 0.0
        %328 = vmatprep.subr.mxu0 0.0
        %329 = vmatpush2.msra.mxu0 0.0
        %330 = vmatprep.subr.mxu0 0.0
        %331 = vmatpush2.msra.mxu0 0.0
        %332 = vmatprep.subr.mxu0 0.0
        %333 = vmatpush2.msra.mxu0 0.0
        %334 = vmatprep.mubr.f32.mxu0 0.0
        %335 = vmatmul.mubr.f32.gmra.mxu0 %v223
        %v336 = vpop.f32.mrf.mxu0
        %v337 = vadd.f32 %v219, %v336
        %v338 = vpop.f32.mrf.mxu0
        %339 = vmatprep.mubr.f32.mxu0 0.0
        %340 = vmatmul.mubr.f32.gmra.mxu0 %v226
        %v341 = vpop.f32.mrf.mxu0
        %v342 = vadd.f32 %v219, %v341
        %v343 = vpop.f32.mrf.mxu0
        %344 = vmatprep.mubr.f32.mxu0 0.0
        %345 = vmatmul.mubr.f32.gmra.mxu0 %v229
        %v346 = vpop.f32.mrf.mxu0
        %v347 = vadd.f32 %v219, %v346
        %v348 = vpop.f32.mrf.mxu0
        %349 = vmatprep.mubr.f32.mxu0 0.0
        %350 = vmatmul.mubr.f32.gmra.mxu0 %v232
        %v351 = vpop.f32.mrf.mxu0
        %v352 = vadd.f32 %v219, %v351
        %v353 = vpop.f32.mrf.mxu0
        %354 = vmatprep.mubr.f32.mxu0 0.0
        %355 = vmatmul.mubr.f32.gmra.mxu0 %v235
        %v356 = vpop.f32.mrf.mxu0
        %v357 = vadd.f32 %v219, %v356
        %v358 = vpop.f32.mrf.mxu0
        %359 = vmatprep.mubr.f32.mxu0 0.0
        %360 = vmatmul.mubr.f32.gmra.mxu0 %v238
        %v361 = vpop.f32.mrf.mxu0
        %v362 = vadd.f32 %v219, %v361
        %v363 = vpop.f32.mrf.mxu0
        %364 = vmatprep.mubr.f32.mxu0 0.0
        %365 = vmatmul.mubr.f32.gmra.mxu0 %v241
        %v366 = vpop.f32.mrf.mxu0
        %v367 = vadd.f32 %v219, %v366
        %v368 = vpop.f32.mrf.mxu0
        %369 = vmatprep.mubr.f32.mxu0 0.0
        %370 = vmatmul.mubr.f32.gmra.mxu0 %v244
        %v371 = vpop.f32.mrf.mxu0
        %v372 = vadd.f32 %v219, %v371
        %v373 = vpop.f32.mrf.mxu0
        %374 = vmatprep.mubr.f32.mxu0 0.0
        %375 = vmatmul.mubr.f32.gmra.mxu0 %v247
        %v376 = vpop.f32.mrf.mxu0
        %v377 = vadd.f32 %v219, %v376
        %v378 = vpop.f32.mrf.mxu0
        %379 = vmatprep.mubr.f32.mxu0 0.0
        %380 = vmatmul.mubr.f32.gmra.mxu0 %v250
        %v381 = vpop.f32.mrf.mxu0
        %v382 = vadd.f32 %v219, %v381
        %v383 = vpop.f32.mrf.mxu0
        %384 = vmatprep.mubr.f32.mxu0 0.0
        %385 = vmatmul.mubr.f32.gmra.mxu0 %v253
        %v386 = vpop.f32.mrf.mxu0
        %v387 = vadd.f32 %v219, %v386
        %v388 = vpop.f32.mrf.mxu0
        %389 = vmatprep.mubr.f32.mxu0 0.0
        %390 = vmatmul.mubr.f32.gmra.mxu0 %v256
        %v391 = vpop.f32.mrf.mxu0
        %v392 = vadd.f32 %v219, %v391
        %v393 = vpop.f32.mrf.mxu0
        %394 = vmatprep.mubr.f32.mxu0 0.0
        %395 = vmatmul.mubr.f32.gmra.mxu0 %v259
        %v396 = vpop.f32.mrf.mxu0
        %v397 = vadd.f32 %v219, %v396
        %v398 = vpop.f32.mrf.mxu0
        %399 = vmatprep.mubr.f32.mxu0 0.0
        %400 = vmatmul.mubr.f32.gmra.mxu0 %v262
        %v401 = vpop.f32.mrf.mxu0
        %v402 = vadd.f32 %v219, %v401
        %v403 = vpop.f32.mrf.mxu0
        %404 = vmatprep.mubr.f32.mxu0 0.0
        %405 = vmatmul.mubr.f32.gmra.mxu0 %v265
        %v406 = vpop.f32.mrf.mxu0
        %v407 = vadd.f32 %v219, %v406
        %v408 = vpop.f32.mrf.mxu0
        %409 = vmatprep.mubr.f32.mxu0 0.0
        %410 = vmatmul.mubr.f32.gmra.mxu0 %v268
        %v411 = vpop.f32.mrf.mxu0
        %v412 = vadd.f32 %v219, %v411
        %v413 = vpop.f32.mrf.mxu0
        %414 = vdwg.mxu0
        %v415 = vmax.f32 %v337, 0.0
        %v416 = vmax.f32 %v342, 0.0
        %v417 = vmax.f32 %v347, 0.0
        %v418 = vmax.f32 %v352, 0.0
        %v419 = vmax.f32 %v357, 0.0
        %v420 = vmax.f32 %v362, 0.0
        %v421 = vmax.f32 %v367, 0.0
        %v422 = vmax.f32 %v372, 0.0
        %v423 = vmax.f32 %v377, 0.0
        %v424 = vmax.f32 %v382, 0.0
        %v425 = vmax.f32 %v387, 0.0
        %v426 = vmax.f32 %v392, 0.0
        %v427 = vmax.f32 %v397, 0.0
        %v428 = vmax.f32 %v402, 0.0
        %v429 = vmax.f32 %v407, 0.0
        %v430 = vmax.f32 %v412, 0.0
        %vm431 = vcmask 785408
        %432 = vst.msk [vmem:[%s172] sm:$0xff] %vm431, %v415
        %433 = vst.msk [vmem:[%s172 + $0x8] sm:$0xff] %vm431, %v416
        %434 = vst.msk [vmem:[%s172 + $0x10] sm:$0xff] %vm431, %v417
        %435 = vst.msk [vmem:[%s172 + $0x18] sm:$0xff] %vm431, %v418
        %436 = vst.msk [vmem:[%s172 + $0x20] sm:$0xff] %vm431, %v419
        %437 = vst.msk [vmem:[%s172 + $0x28] sm:$0xff] %vm431, %v420
        %438 = vst.msk [vmem:[%s172 + $0x30] sm:$0xff] %vm431, %v421
        %439 = vst.msk [vmem:[%s172 + $0x38] sm:$0xff] %vm431, %v422
        %440 = vst.msk [vmem:[%s172 + $0x40] sm:$0xff] %vm431, %v423
        %441 = vst.msk [vmem:[%s172 + $0x48] sm:$0xff] %vm431, %v424
        %442 = vst.msk [vmem:[%s172 + $0x50] sm:$0xff] %vm431, %v425
        %443 = vst.msk [vmem:[%s172 + $0x58] sm:$0xff] %vm431, %v426
        %444 = vst.msk [vmem:[%s172 + $0x60] sm:$0xff] %vm431, %v427
        %445 = vst.msk [vmem:[%s172 + $0x68] sm:$0xff] %vm431, %v428
        %446 = vst.msk [vmem:[%s172 + $0x70] sm:$0xff] %vm431, %v429
        %447 = vst.msk [vmem:[%s172 + $0x78] sm:$0xff] %vm431, %v430
        %s448 = sand.u32 %s90, 1
        %s449 = sand.u32 %s90, 1
        %s450 = smul.addr %s449, 128
        %s451 = scalar_lea.vmem [#allocation2], %s450
        // Predicated region
        $region33: #{tpu_custom_call.1} parent=31 // pred_check
          %p452 = pneg %p100
        $region34: #{tpu_custom_call.1} parent=31 // pred_check_branch
          %454 = sbr.rel (%p452) target = $region36
        $region35: #{tpu_custom_call.1} parent=31 // pred_region
          %s455 = smul.u32 16, %s14
          %s456 = ssub.s32 38, %s455
          %p457 = scmp.lt.s32.totalorder %s456, 16
          %s458 = scalar_select %p457, %s456, 16
          %s459 = smul.u32 128, %s458
          %p460 = scmp.ne.s32.totalorder 0, %s459
          %s461 = smul.addr %s455, 8
          %s462 = scalar_lea.vmem %s3, %s461
          // Predicated region
          $region37: #{tpu_custom_call.1} parent=35 // pred_check
            %p463 = pneg %p460
          $region38: #{tpu_custom_call.1} parent=35 // pred_check_branch
            %465 = sbr.rel (%p463) target = $region40
          $region39: #{tpu_custom_call.1} parent=35 // pred_region
            // Predicated region
            $region41: #{tpu_custom_call.1} parent=39 // pred_check
              _
            $region42: #{tpu_custom_call.1} parent=39 // pred_check_branch
              %467 = sbr.rel (0) target = $region44
            $region43: #{tpu_custom_call.1} parent=39 // pred_region
              // Predicated region
              $region63: #{tpu_custom_call.1} parent=43 // pred_check
                _
              $region64: #{tpu_custom_call.1} parent=43 // pred_check_branch
                %547 = sbr.rel (0) target = $region66
              $region65: #{tpu_custom_call.1} parent=43 // pred_region
                %s548 = sshrl.u32 %s458, 4
                // While loop
                $region67: #{tpu_custom_call.1} parent=65 // loop_pre_header
                  _
                $region68: #{tpu_custom_call.1} parent=65 // loop_header
                  %s550 = sphi 0, %s552
                  %p551 = scmp.ge.s32.totalorder %s550, %s548
                  %s555 = sphi 0, %s592
                  %s556 = sphi %s451, %s595
                  %s557 = sphi %s462, %s596
                $region69: #{tpu_custom_call.1} parent=65 // loop_header_branch
                  %554 = sbr.rel (%p551) target = $region73
                $region70: #{tpu_custom_call.1} parent=65 // loop_body
                  %v558 = vld [vmem:[%s556] sm:$0xff]
                  %559 = vst [vmem:[%s557] sm:$0xff] %v558
                  %v560 = vld [vmem:[%s556 + $0x8] sm:$0xff]
                  %561 = vst [vmem:[%s557 + $0x8] sm:$0xff] %v560
                  %v562 = vld [vmem:[%s556 + $0x10] sm:$0xff]
                  %563 = vst [vmem:[%s557 + $0x10] sm:$0xff] %v562
                  %v564 = vld [vmem:[%s556 + $0x18] sm:$0xff]
                  %565 = vst [vmem:[%s557 + $0x18] sm:$0xff] %v564
                  %v566 = vld [vmem:[%s556 + $0x20] sm:$0xff]
                  %567 = vst [vmem:[%s557 + $0x20] sm:$0xff] %v566
                  %v568 = vld [vmem:[%s556 + $0x28] sm:$0xff]
                  %569 = vst [vmem:[%s557 + $0x28] sm:$0xff] %v568
                  %v570 = vld [vmem:[%s556 + $0x30] sm:$0xff]
                  %571 = vst [vmem:[%s557 + $0x30] sm:$0xff] %v570
                  %v572 = vld [vmem:[%s556 + $0x38] sm:$0xff]
                  %573 = vst [vmem:[%s557 + $0x38] sm:$0xff] %v572
                  %v574 = vld [vmem:[%s556 + $0x40] sm:$0xff]
                  %575 = vst [vmem:[%s557 + $0x40] sm:$0xff] %v574
                  %v576 = vld [vmem:[%s556 + $0x48] sm:$0xff]
                  %577 = vst [vmem:[%s557 + $0x48] sm:$0xff] %v576
                  %v578 = vld [vmem:[%s556 + $0x50] sm:$0xff]
                  %579 = vst [vmem:[%s557 + $0x50] sm:$0xff] %v578
                  %v580 = vld [vmem:[%s556 + $0x58] sm:$0xff]
                  %581 = vst [vmem:[%s557 + $0x58] sm:$0xff] %v580
                  %v582 = vld [vmem:[%s556 + $0x60] sm:$0xff]
                  %583 = vst [vmem:[%s557 + $0x60] sm:$0xff] %v582
                  %v584 = vld [vmem:[%s556 + $0x68] sm:$0xff]
                  %585 = vst [vmem:[%s557 + $0x68] sm:$0xff] %v584
                  %v586 = vld [vmem:[%s556 + $0x70] sm:$0xff]
                  %587 = vst [vmem:[%s557 + $0x70] sm:$0xff] %v586
                  %v588 = vld [vmem:[%s556 + $0x78] sm:$0xff]
                  %589 = vst [vmem:[%s557 + $0x78] sm:$0xff] %v588
                  %s590 = sadd.s32 1, %s555
                  %p591 = scmp.ge.s32.totalorder %s590, %s548
                  %s592 = scalar_select %p591, 0, %s590
                  %s593 = smul.u32 %s592, 128
                  %s594 = smul.u32 %s592, 128
                  %s595 = scalar_lea.vmem %s451, %s593 [#allocation2]
                  %s596 = scalar_lea.vmem %s462, %s594
                $region71: #{tpu_custom_call.1} parent=65 // loop_footer
                  %s552 = sadd.s32 %s550, 1
                $region72: #{tpu_custom_call.1} parent=65 // loop_footer_branch
                  %549 = sbr.rel target = $region68
                $region73: #{tpu_custom_call.1} parent=65 // loop_exit
                  _
                %s597 = sshrl.u32 %s458, 4
                %s598 = sand.u32 %s458, 15
                %s599 = smul.u32 %s597, 16
                %s600 = smul.u32 8, %s599
                %s601 = scalar_lea.vmem %s451, %s600 [#allocation2]
                %s602 = smul.u32 8, %s599
                %s603 = scalar_lea.vmem %s462, %s602
                // While loop
                $region74: #{tpu_custom_call.1} parent=65 // loop_pre_header
                  _
                $region75: #{tpu_custom_call.1} parent=65 // loop_header
                  %s605 = sphi 0, %s607
                  %p606 = scmp.ge.s32.totalorder %s605, %s598
                  %s610 = sphi 0, %s617
                  %s611 = sphi %s601, %s620
                  %s612 = sphi %s603, %s621
                $region76: #{tpu_custom_call.1} parent=65 // loop_header_branch
                  %609 = sbr.rel (%p606) target = $region80
                $region77: #{tpu_custom_call.1} parent=65 // loop_body
                  %v613 = vld [vmem:[%s611] sm:$0xff]
                  %614 = vst [vmem:[%s612] sm:$0xff] %v613
                  %s615 = sadd.s32 1, %s610
                  %p616 = scmp.ge.s32.totalorder %s615, %s598
                  %s617 = scalar_select %p616, 0, %s615
                  %s618 = smul.u32 %s617, 8
                  %s619 = smul.u32 %s617, 8
                  %s620 = scalar_lea.vmem %s601, %s618 [#allocation2]
                  %s621 = scalar_lea.vmem %s603, %s619
                $region78: #{tpu_custom_call.1} parent=65 // loop_footer
                  %s607 = sadd.s32 %s605, 1
                $region79: #{tpu_custom_call.1} parent=65 // loop_footer_branch
                  %604 = sbr.rel target = $region75
                $region80: #{tpu_custom_call.1} parent=65 // loop_exit
                  _
              $region66: #{tpu_custom_call.1} parent=43 // pred_fallthru
                _
              // Predicated region
              $region81: #{tpu_custom_call.1} parent=43 // pred_check
                _
              $region82: #{tpu_custom_call.1} parent=43 // pred_check_branch
                %623 = sbr.rel target = $region84
              $region83: #{tpu_custom_call.1} parent=43 // pred_region
                _
              $region84: #{tpu_custom_call.1} parent=43 // pred_fallthru
                _
            $region44: #{tpu_custom_call.1} parent=39 // pred_fallthru
              _
            // Predicated region
            $region45: #{tpu_custom_call.1} parent=39 // pred_check
              _
            $region46: #{tpu_custom_call.1} parent=39 // pred_check_branch
              %469 = sbr.rel target = $region48
            $region47: #{tpu_custom_call.1} parent=39 // pred_region
              %s471 = ssub.s32 256, 1
              %s472 = sshrl.u32 %s458, 4
              // While loop
              $region49: #{tpu_custom_call.1} parent=47 // loop_pre_header
                _
              $region50: #{tpu_custom_call.1} parent=47 // loop_header
                %s474 = sphi 0, %s476
                %p475 = scmp.ge.s32.totalorder %s474, %s472
                %s479 = sphi 0, %s516
                %s480 = sphi %s451, %s519
                %s481 = sphi %s462, %s520
              $region51: #{tpu_custom_call.1} parent=47 // loop_header_branch
                %478 = sbr.rel (%p475) target = $region55
              $region52: #{tpu_custom_call.1} parent=47 // loop_body
                %v482 = vld [vmem:[%s480] sm:%s471]
                %483 = vst [vmem:[%s481] sm:%s471] %v482
                %v484 = vld [vmem:[%s480 + $0x8] sm:%s471]
                %485 = vst [vmem:[%s481 + $0x8] sm:%s471] %v484
                %v486 = vld [vmem:[%s480 + $0x10] sm:%s471]
                %487 = vst [vmem:[%s481 + $0x10] sm:%s471] %v486
                %v488 = vld [vmem:[%s480 + $0x18] sm:%s471]
                %489 = vst [vmem:[%s481 + $0x18] sm:%s471] %v488
                %v490 = vld [vmem:[%s480 + $0x20] sm:%s471]
                %491 = vst [vmem:[%s481 + $0x20] sm:%s471] %v490
                %v492 = vld [vmem:[%s480 + $0x28] sm:%s471]
                %493 = vst [vmem:[%s481 + $0x28] sm:%s471] %v492
                %v494 = vld [vmem:[%s480 + $0x30] sm:%s471]
                %495 = vst [vmem:[%s481 + $0x30] sm:%s471] %v494
                %v496 = vld [vmem:[%s480 + $0x38] sm:%s471]
                %497 = vst [vmem:[%s481 + $0x38] sm:%s471] %v496
                %v498 = vld [vmem:[%s480 + $0x40] sm:%s471]
                %499 = vst [vmem:[%s481 + $0x40] sm:%s471] %v498
                %v500 = vld [vmem:[%s480 + $0x48] sm:%s471]
                %501 = vst [vmem:[%s481 + $0x48] sm:%s471] %v500
                %v502 = vld [vmem:[%s480 + $0x50] sm:%s471]
                %503 = vst [vmem:[%s481 + $0x50] sm:%s471] %v502
                %v504 = vld [vmem:[%s480 + $0x58] sm:%s471]
                %505 = vst [vmem:[%s481 + $0x58] sm:%s471] %v504
                %v506 = vld [vmem:[%s480 + $0x60] sm:%s471]
                %507 = vst [vmem:[%s481 + $0x60] sm:%s471] %v506
                %v508 = vld [vmem:[%s480 + $0x68] sm:%s471]
                %509 = vst [vmem:[%s481 + $0x68] sm:%s471] %v508
                %v510 = vld [vmem:[%s480 + $0x70] sm:%s471]
                %511 = vst [vmem:[%s481 + $0x70] sm:%s471] %v510
                %v512 = vld [vmem:[%s480 + $0x78] sm:%s471]
                %513 = vst [vmem:[%s481 + $0x78] sm:%s471] %v512
                %s514 = sadd.s32 1, %s479
                %p515 = scmp.ge.s32.totalorder %s514, %s472
                %s516 = scalar_select %p515, 0, %s514
                %s517 = smul.u32 %s516, 128
                %s518 = smul.u32 %s516, 128
                %s519 = scalar_lea.vmem %s451, %s517 [#allocation2]
                %s520 = scalar_lea.vmem %s462, %s518
              $region53: #{tpu_custom_call.1} parent=47 // loop_footer
                %s476 = sadd.s32 %s474, 1
              $region54: #{tpu_custom_call.1} parent=47 // loop_footer_branch
                %473 = sbr.rel target = $region50
              $region55: #{tpu_custom_call.1} parent=47 // loop_exit
                _
              %s521 = sshrl.u32 %s458, 4
              %s522 = sand.u32 %s458, 15
              %s523 = smul.u32 %s521, 16
              %s524 = smul.u32 8, %s523
              %s525 = scalar_lea.vmem %s451, %s524 [#allocation2]
              %s526 = smul.u32 8, %s523
              %s527 = scalar_lea.vmem %s462, %s526
              // While loop
              $region56: #{tpu_custom_call.1} parent=47 // loop_pre_header
                _
              $region57: #{tpu_custom_call.1} parent=47 // loop_header
                %s529 = sphi 0, %s531
                %p530 = scmp.ge.s32.totalorder %s529, %s522
                %s534 = sphi 0, %s541
                %s535 = sphi %s525, %s544
                %s536 = sphi %s527, %s545
              $region58: #{tpu_custom_call.1} parent=47 // loop_header_branch
                %533 = sbr.rel (%p530) target = $region62
              $region59: #{tpu_custom_call.1} parent=47 // loop_body
                %v537 = vld [vmem:[%s535] sm:%s471]
                %538 = vst [vmem:[%s536] sm:%s471] %v537
                %s539 = sadd.s32 1, %s534
                %p540 = scmp.ge.s32.totalorder %s539, %s522
                %s541 = scalar_select %p540, 0, %s539
                %s542 = smul.u32 %s541, 8
                %s543 = smul.u32 %s541, 8
                %s544 = scalar_lea.vmem %s525, %s542 [#allocation2]
                %s545 = scalar_lea.vmem %s527, %s543
              $region60: #{tpu_custom_call.1} parent=47 // loop_footer
                %s531 = sadd.s32 %s529, 1
              $region61: #{tpu_custom_call.1} parent=47 // loop_footer_branch
                %528 = sbr.rel target = $region57
              $region62: #{tpu_custom_call.1} parent=47 // loop_exit
                _
            $region48: #{tpu_custom_call.1} parent=39 // pred_fallthru
              _
          $region40: #{tpu_custom_call.1} parent=35 // pred_fallthru
            _
          %624 = vnop
        $region36: #{tpu_custom_call.1} parent=31 // pred_fallthru
          _
      $region32: #{tpu_custom_call.1} parent=5 // pred_fallthru
        _
      %p625 = scmp.le.s32.totalorder 2, %s9
      // Predicated region
      $region85: #{tpu_custom_call.1} parent=5 // pred_check
        %p626 = pneg %p625
      $region86: #{tpu_custom_call.1} parent=5 // pred_check_branch
        %628 = sbr.rel (%p626) target = $region88
      $region87: #{tpu_custom_call.1} parent=5 // pred_region
        %s629 = ssub.s32 %s9, 2
        // Predicated region
        $region89: #{tpu_custom_call.1} parent=87 // pred_check
          %p630 = pneg %p106
        $region90: #{tpu_custom_call.1} parent=87 // pred_check_branch
          %632 = sbr.rel (%p630) target = $region92
        $region91: #{tpu_custom_call.1} parent=87 // pred_region
          %s633 = sand.u32 %s91, 1
          %s634 = sand.u32 %s91, 1
          %s635 = smul.addr %s634, 128
          %s636 = scalar_lea.vmem [#allocation2], %s635
        $region92: #{tpu_custom_call.1} parent=87 // pred_fallthru
          _
      $region88: #{tpu_custom_call.1} parent=5 // pred_fallthru
        _
    $region6: #{tpu_custom_call.1} parent=1 // loop_footer
      %s13 = sadd.s32 1, %s9
    $region7: #{tpu_custom_call.1} parent=1 // loop_footer_branch
      %8 = sbr.rel target = $region3
    $region8: #{tpu_custom_call.1} parent=1 // loop_exit
      _

// kernel: tpu_custom_call.1
$region0: #{tpu_custom_call.1}
  #allocation0 [shape = 'u32[]', space=smem, size = 0x4, offset = 0x4, fixed_abs, tag = 'smem constant byte address 0x4 - core index']
  #allocation1 [shape = 'u32[144,128]{1,0:T(1,128)}', space=vmem, size = 0x12000, scoped, tag = 'internal scratch']
  %s0 = inlined_call_operand.vmem [shape: f32[300,48], index: 0, kind: input, shape index: {}]
  %s1 = inlined_call_operand.vmem [shape: f32[48,96], index: 1, kind: input, shape index: {}]
  %s2 = inlined_call_operand.vmem [shape: f32[1,96], index: 2, kind: input, shape index: {}]
  %s3 = inlined_call_operand.vmem [shape: f32[300,96], index: 3, kind: output, shape index: {}]
  %s4 = sld [smem:[#allocation0]]
  $region93: #{tpu_custom_call.1} parent=0
    _
  %s6 = ssub.s32 1, %s4
  %s7 = scalar_select 0, %s6, %s4
  $region1: #{tpu_custom_call.1} parent=0
    #allocation2 [shape = 'u8[131072]{0}', space=vmem, size = 0x20000, scoped, tag = 'output window, operand 0']
    loop: start=0, step=1, limit=5
    $region2: #{tpu_custom_call.1} parent=1 // loop_pre_header
      _
    $region3: #{tpu_custom_call.1} parent=1 // loop_header
      %s9 = sphi 0, %s13
      %p10 = scmp.ge.s32.totalorder %s9, 5
      %s19 = sphi 0, %s21
      %s22 = sphi 0, %s19
      %s23 = sphi 0, %s22
      %s39 = sphi 0, %s23
      %s43 = sphi 0, %s43
      %s45 = sphi 0, %s43
      %s46 = sphi 0, %s45
      %s60 = sphi 0, %s46
      %s64 = sphi 0, %s64
      %s66 = sphi 0, %s64
      %s67 = sphi 0, %s66
      %s81 = sphi 0, %s67
      %s87 = sphi 0, %s89
      %s90 = sphi 0, %s87
      %s91 = sphi 0, %s90
      %s107 = sphi 0, %s91
    $region4: #{tpu_custom_call.1} parent=1 // loop_header_branch
      %12 = sbr.rel (%p10) target = $region8
    $region5: #{tpu_custom_call.1} parent=1 // loop_body
      %s14 = ssub.s32 %s9, 1
      %s15 = ssub.s32 %s9, 2
      %s16 = sadd.s32 %s9, 1
      %s17 = ssub.s32 %s9, %s16
      %p18 = scmp.eq.s32.totalorder %s17, 0
      %s20 = sadd.s32 %s19, 1
      %s21 = scalar_select %p18, %s19, %s20
      %p24 = pneg %p18
      %p25 = scmp.eq.s32.totalorder %s9, 2
      %p26 = por %p24, %p25
      %p27 = scmp.ne.s32.totalorder %s19, %s22
      %p28 = scmp.eq.s32.totalorder %s9, 0
      %p29 = por %p27, %p28
      %p30 = scmp.ne.s32.totalorder %s19, %s22
      %p31 = scmp.eq.s32.totalorder %s14, 2
      %p32 = por %p30, %p31
      %p33 = scmp.ne.s32.totalorder %s22, %s23
      %p34 = scmp.eq.s32.totalorder %s14, 0
      %p35 = por %p33, %p34
      %p36 = scmp.ne.s32.totalorder %s22, %s23
      %p37 = scmp.eq.s32.totalorder %s15, 2
      %p38 = por %p36, %p37
      %p40 = scmp.ne.s32.totalorder %s23, %s39
      %p41 = scmp.eq.s32.totalorder %s15, 0
      %p42 = por %p40, %p41
      %s44 = sadd.s32 %s43, 1
      %p47 = scmp.eq.s32.totalorder %s9, 2
      %p48 = scmp.ne.s32.totalorder %s43, %s45
      %p49 = scmp.eq.s32.totalorder %s9, 0
      %p50 = por %p48, %p49
      %p51 = scmp.ne.s32.totalorder %s43, %s45
      %p52 = scmp.eq.s32.totalorder %s14, 2
      %p53 = por %p51, %p52
      %p54 = scmp.ne.s32.totalorder %s45, %s46
      %p55 = scmp.eq.s32.totalorder %s14, 0
      %p56 = por %p54, %p55
      %p57 = scmp.ne.s32.totalorder %s45, %s46
      %p58 = scmp.eq.s32.totalorder %s15, 2
      %p59 = por %p57, %p58
      %p61 = scmp.ne.s32.totalorder %s46, %s60
      %p62 = scmp.eq.s32.totalorder %s15, 0
      %p63 = por %p61, %p62
      %s65 = sadd.s32 %s64, 1
      %p68 = scmp.eq.s32.totalorder %s9, 2
      %p69 = scmp.ne.s32.totalorder %s64, %s66
      %p70 = scmp.eq.s32.totalorder %s9, 0
      %p71 = por %p69, %p70
      %p72 = scmp.ne.s32.totalorder %s64, %s66
      %p73 = scmp.eq.s32.totalorder %s14, 2
      %p74 = por %p72, %p73
      %p75 = scmp.ne.s32.totalorder %s66, %s67
      %p76 = scmp.eq.s32.totalorder %s14, 0
      %p77 = por %p75, %p76
      %p78 = scmp.ne.s32.totalorder %s66, %s67
      %p79 = scmp.eq.s32.totalorder %s15, 2
      %p80 = por %p78, %p79
      %p82 = scmp.ne.s32.totalorder %s67, %s81
      %p83 = scmp.eq.s32.totalorder %s15, 0
      %p84 = por %p82, %p83
      %s85 = ssub.s32 %s9, %s16
      %p86 = scmp.eq.s32.totalorder %s85, 0
      %s88 = sadd.s32 %s87, 1
      %s89 = scalar_select %p86, %s87, %s88
      %p92 = pneg %p86
      %p93 = scmp.eq.s32.totalorder %s9, 2
      %p94 = por %p92, %p93
      %p95 = scmp.ne.s32.totalorder %s87, %s90
      %p96 = scmp.eq.s32.totalorder %s9, 0
      %p97 = por %p95, %p96
      %p98 = scmp.ne.s32.totalorder %s87, %s90
      %p99 = scmp.eq.s32.totalorder %s14, 2
      %p100 = por %p98, %p99
      %p101 = scmp.ne.s32.totalorder %s90, %s91
      %p102 = scmp.eq.s32.totalorder %s14, 0
      %p103 = por %p101, %p102
      %p104 = scmp.ne.s32.totalorder %s90, %s91
      %p105 = scmp.eq.s32.totalorder %s15, 2
      %p106 = por %p104, %p105
      %p108 = scmp.ne.s32.totalorder %s91, %s107
      %p109 = scmp.eq.s32.totalorder %s15, 0
      %p110 = por %p108, %p109
      %p111 = scmp.le.s32.totalorder 1, %s9
      %p112 = scmp.lt.s32.totalorder %s9, 4
      %p113 = pnand %p111, %p112
      %p114 = pneg %p113
      // Predicated region
      $region9: #{tpu_custom_call.1} parent=5 // pred_check
        _
      $region10: #{tpu_custom_call.1} parent=5 // pred_check_branch
        %116 = sbr.rel (%p113) target = $region12
      $region11: #{tpu_custom_call.1} parent=5 // pred_region
        %s117 = ssub.s32 %s9, 1
        // Predicated region
        $region13: #{tpu_custom_call.1} parent=11 // pred_check
          %p118 = pneg %p56
        $region14: #{tpu_custom_call.1} parent=11 // pred_check_branch
          %120 = sbr.rel (%p118) target = $region16
        $region15: #{tpu_custom_call.1} parent=11 // pred_region
          _
        $region16: #{tpu_custom_call.1} parent=11 // pred_fallthru
          _
        // Predicated region
        $region17: #{tpu_custom_call.1} parent=11 // pred_check
          %p121 = pneg %p77
        $region18: #{tpu_custom_call.1} parent=11 // pred_check_branch
          %123 = sbr.rel (%p121) target = $region20
        $region19: #{tpu_custom_call.1} parent=11 // pred_region
          _
        $region20: #{tpu_custom_call.1} parent=11 // pred_fallthru
          _
      $region12: #{tpu_custom_call.1} parent=5 // pred_fallthru
        _
      %p124 = scmp.lt.s32.totalorder %s9, 3
      // Predicated region
      $region21: #{tpu_custom_call.1} parent=5 // pred_check
        %p125 = pneg %p124
      $region22: #{tpu_custom_call.1} parent=5 // pred_check_branch
        %127 = sbr.rel (%p125) target = $region24
      $region23: #{tpu_custom_call.1} parent=5 // pred_region
        // Predicated region
        $region25: #{tpu_custom_call.1} parent=23 // pred_check
          %p128 = pneg %p29
        $region26: #{tpu_custom_call.1} parent=23 // pred_check_branch
          %130 = sbr.rel (%p128) target = $region28
        $region27: #{tpu_custom_call.1} parent=23 // pred_region
          %s131 = smul.u32 16, %s9
          %s132 = ssub.s32 38, %s131
          %p133 = scmp.lt.s32.totalorder %s132, 16
          %s134 = scalar_select %p133, %s132, 16
          %s135 = smul.u32 128, %s134
          %p136 = scmp.lt.s32.totalorder %s131, 37
          %s137 = scalar_select %p136, %s131, 37
          %s138 = smul.addr %s137, 8
          %s139 = scalar_lea.vmem %s0, %s138
          %s140 = smul.u32 16, %s9
          %s141 = ssub.s32 38, %s140
          %p142 = scmp.lt.s32.totalorder %s141, 16
          %s143 = scalar_select %p142, %s141, 16
          %s144 = smul.u32 128, %s143
        $region28: #{tpu_custom_call.1} parent=23 // pred_fallthru
          _
      $region24: #{tpu_custom_call.1} parent=5 // pred_fallthru
        _
      %p145 = scmp.le.s32.totalorder 1, %s9
      %p146 = scmp.lt.s32.totalorder %s9, 4
      %p147 = pnand %p145, %p146
      %p148 = pneg %p147
      // Predicated region
      $region29: #{tpu_custom_call.1} parent=5 // pred_check
        _
      $region30: #{tpu_custom_call.1} parent=5 // pred_check_branch
        %150 = sbr.rel (%p147) target = $region32
      $region31: #{tpu_custom_call.1} parent=5 // pred_region
        %s151 = ssub.s32 %s9, 1
        %s152 = smul.u32 16, %s14
        %s153 = ssub.s32 38, %s152
        %p154 = scmp.lt.s32.totalorder %s153, 16
        %s155 = scalar_select %p154, %s153, 16
        %s156 = smul.u32 128, %s155
        %p157 = scmp.lt.s32.totalorder %s152, 37
        %s158 = scalar_select %p157, %s152, 37
        %s159 = smul.addr %s158, 8
        %s160 = scalar_lea.vmem %s0, %s159
        %p161 = pneg %p35
        %p162 = pneg %p32
        %p163 = pneg %p56
        %p164 = pneg %p53
        %p165 = pneg %p77
        %p166 = pneg %p74
        %p167 = pneg %p103
        %p168 = pneg %p100
        %s169 = sand.u32 %s90, 1
        %s170 = sand.u32 %s90, 1
        %s171 = smul.addr %s170, 128
        %s172 = scalar_lea.vmem [#allocation2], %s171
        %s173 = smul.u32 16, %s14
        %s174 = ssub.s32 38, %s173
        %p175 = scmp.lt.s32.totalorder %s174, 16
        %s176 = scalar_select %p175, %s174, 16
        %s177 = smul.u32 128, %s176
        %p178 = scmp.lt.s32.totalorder %s173, 37
        %s179 = scalar_select %p178, %s173, 37
        %s180 = smul.addr %s179, 8
        %s181 = scalar_lea.vmem %s0, %s180
        %s182 = smul.u32 16, %s14
        %s183 = ssub.s32 38, %s182
        %p184 = scmp.lt.s32.totalorder %s183, 16
        %s185 = scalar_select %p184, %s183, 16
        %s186 = smul.u32 128, %s185
        %s187 = smul.u32 16, %s14
        %s188 = ssub.s32 38, %s187
        %p189 = scmp.lt.s32.totalorder %s188, 16
        %s190 = scalar_select %p189, %s188, 16
        %s191 = smul.u32 128, %s190
        %v192 = vld [vmem:[%s181] sm:$0xff]
        %v193 = vld [vmem:[%s181 + $0x8] sm:$0xff]
        %v194 = vld [vmem:[%s181 + $0x10] sm:$0xff]
        %v195 = vld [vmem:[%s181 + $0x18] sm:$0xff]
        %v196 = vld [vmem:[%s181 + $0x20] sm:$0xff]
        %v197 = vld [vmem:[%s181 + $0x28] sm:$0xff]
        %v198 = vld [vmem:[%s181 + $0x30] sm:$0xff]
        %v199 = vld [vmem:[%s181 + $0x38] sm:$0xff]
        %v200 = vld [vmem:[%s181 + $0x40] sm:$0xff]
        %v201 = vld [vmem:[%s181 + $0x48] sm:$0xff]
        %v202 = vld [vmem:[%s181 + $0x50] sm:$0xff]
        %v203 = vld [vmem:[%s181 + $0x58] sm:$0xff]
        %v204 = vld [vmem:[%s181 + $0x60] sm:$0xff]
        %v205 = vld [vmem:[%s181 + $0x68] sm:$0xff]
        %v206 = vld [vmem:[%s181 + $0x70] sm:$0xff]
        %v207 = vld [vmem:[%s181 + $0x78] sm:$0xff]
        %v208 = vld [vmem:[%s1] sm:$0xff]
        %v209 = vld [vmem:[%s1 + $0x8] sm:$0xff]
        %v210 = vld [vmem:[%s1 + $0x10] sm:$0xff]
        %v211 = vld [vmem:[%s1 + $0x18] sm:$0xff]
        %v212 = vld [vmem:[%s1 + $0x20] sm:$0xff]
        %v213 = vld [vmem:[%s1 + $0x28] sm:$0xff]
        %v214 = vld [vmem:[%s2] sm:$0x1]
        %v216 = vlaneseq
        %v217 = vshrl.u32 %v216, 7
        %v218 = vsub.s32 0, %v217
        %v219 = vrot.slane %v214, %v218
        %vm221 = vcmask 392192
        %v223 = vsel %vm221, %v192, 0
        %v226 = vsel %vm221, %v193, 0
        %v229 = vsel %vm221, %v194, 0
        %v232 = vsel %vm221, %v195, 0
        %v235 = vsel %vm221, %v196, 0
        %v238 = vsel %vm221, %v197, 0
        %v241 = vsel %vm221, %v198, 0
        %v244 = vsel %vm221, %v199, 0
        %v247 = vsel %vm221, %v200, 0
        %v250 = vsel %vm221, %v201, 0
        %v253 = vsel %vm221, %v202, 0
        %v256 = vsel %vm221, %v203, 0
        %v259 = vsel %vm221, %v204, 0
        %v262 = vsel %vm221, %v205, 0
        %v265 = vsel %vm221, %v206, 0
        %v268 = vsel %vm221, %v207, 0
        %270 = vmatprep.subr.mxu0 0.0
        %271 = vmatpush1.msra.mxu0 0.0
        %272 = vmatprep.subr.mxu0 0.0
        %273 = vmatpush1.msra.mxu0 0.0
        %274 = vmatprep.subr.mxu0 0.0
        %275 = vmatpush1.msra.mxu0 0.0
        %276 = vmatprep.subr.mxu0 0.0
        %277 = vmatpush1.msra.mxu0 0.0
        %278 = vmatprep.subr.mxu0 0.0
        %279 = vmatpush1.msra.mxu0 0.0
        %280 = vmatprep.subr.mxu0 0.0
        %281 = vmatpush1.msra.mxu0 0.0
        %282 = vmatprep.subr.mxu0 0.0
        %283 = vmatpush1.msra.mxu0 0.0
        %284 = vmatprep.subr.mxu0 0.0
        %285 = vmatpush1.msra.mxu0 0.0
        %286 = vmatprep.subr.mxu0 0.0
        %287 = vmatpush1.msra.mxu0 0.0
        %288 = vmatprep.subr.mxu0 0.0
        %289 = vmatpush1.msra.mxu0 0.0
        %290 = vmatprep.subr.mxu0 0.0
        %291 = vmatpush1.msra.mxu0 %v213
        %292 = vmatprep.subr.mxu0 0.0
        %293 = vmatpush1.msra.mxu0 %v212
        %294 = vmatprep.subr.mxu0 0.0
        %295 = vmatpush1.msra.mxu0 %v211
        %296 = vmatprep.subr.mxu0 0.0
        %297 = vmatpush1.msra.mxu0 %v210
        %298 = vmatprep.subr.mxu0 0.0
        %299 = vmatpush1.msra.mxu0 %v209
        %300 = vmatprep.subr.mxu0 0.0
        %301 = vmatpush1.msra.mxu0 %v208
        %302 = vmatprep.subr.mxu0 0.0
        %303 = vmatpush2.msra.mxu0 0.0
        %304 = vmatprep.subr.mxu0 0.0
        %305 = vmatpush2.msra.mxu0 0.0
        %306 = vmatprep.subr.mxu0 0.0
        %307 = vmatpush2.msra.mxu0 0.0
        %308 = vmatprep.subr.mxu0 0.0
        %309 = vmatpush2.msra.mxu0 0.0
        %310 = vmatprep.subr.mxu0 0.0
        %311 = vmatpush2.msra.mxu0 0.0
        %312 = vmatprep.subr.mxu0 0.0
        %313 = vmatpush2.msra.mxu0 0.0
        %314 = vmatprep.subr.mxu0 0.0
        %315 = vmatpush2.msra.mxu0 0.0
        %316 = vmatprep.subr.mxu0 0.0
        %317 = vmatpush2.msra.mxu0 0.0
        %318 = vmatprep.subr.mxu0 0.0
        %319 = vmatpush2.msra.mxu0 0.0
        %320 = vmatprep.subr.mxu0 0.0
        %321 = vmatpush2.msra.mxu0 0.0
        %322 = vmatprep.subr.mxu0 0.0
        %323 = vmatpush2.msra.mxu0 0.0
        %324 = vmatprep.subr.mxu0 0.0
        %325 = vmatpush2.msra.mxu0 0.0
        %326 = vmatprep.subr.mxu0 0.0
        %327 = vmatpush2.msra.mxu0 0.0
        %328 = vmatprep.subr.mxu0 0.0
        %329 = vmatpush2.msra.mxu0 0.0
        %330 = vmatprep.subr.mxu0 0.0
        %331 = vmatpush2.msra.mxu0 0.0
        %332 = vmatprep.subr.mxu0 0.0
        %333 = vmatpush2.msra.mxu0 0.0
        %334 = vmatprep.mubr.f32.mxu0 0.0
        %335 = vmatmul.mubr.f32.gmra.mxu0 %v223
        %v336 = vpop.f32.mrf.mxu0
        %v337 = vadd.f32 %v219, %v336
        %v338 = vpop.f32.mrf.mxu0
        %339 = vmatprep.mubr.f32.mxu0 0.0
        %340 = vmatmul.mubr.f32.gmra.mxu0 %v226
        %v341 = vpop.f32.mrf.mxu0
        %v342 = vadd.f32 %v219, %v341
        %v343 = vpop.f32.mrf.mxu0
        %344 = vmatprep.mubr.f32.mxu0 0.0
        %345 = vmatmul.mubr.f32.gmra.mxu0 %v229
        %v346 = vpop.f32.mrf.mxu0
        %v347 = vadd.f32 %v219, %v346
        %v348 = vpop.f32.mrf.mxu0
        %349 = vmatprep.mubr.f32.mxu0 0.0
        %350 = vmatmul.mubr.f32.gmra.mxu0 %v232
        %v351 = vpop.f32.mrf.mxu0
        %v352 = vadd.f32 %v219, %v351
        %v353 = vpop.f32.mrf.mxu0
        %354 = vmatprep.mubr.f32.mxu0 0.0
        %355 = vmatmul.mubr.f32.gmra.mxu0 %v235
        %v356 = vpop.f32.mrf.mxu0
        %v357 = vadd.f32 %v219, %v356
        %v358 = vpop.f32.mrf.mxu0
        %359 = vmatprep.mubr.f32.mxu0 0.0
        %360 = vmatmul.mubr.f32.gmra.mxu0 %v238
        %v361 = vpop.f32.mrf.mxu0
        %v362 = vadd.f32 %v219, %v361
        %v363 = vpop.f32.mrf.mxu0
        %364 = vmatprep.mubr.f32.mxu0 0.0
        %365 = vmatmul.mubr.f32.gmra.mxu0 %v241
        %v366 = vpop.f32.mrf.mxu0
        %v367 = vadd.f32 %v219, %v366
        %v368 = vpop.f32.mrf.mxu0
        %369 = vmatprep.mubr.f32.mxu0 0.0
        %370 = vmatmul.mubr.f32.gmra.mxu0 %v244
        %v371 = vpop.f32.mrf.mxu0
        %v372 = vadd.f32 %v219, %v371
        %v373 = vpop.f32.mrf.mxu0
        %374 = vmatprep.mubr.f32.mxu0 0.0
        %375 = vmatmul.mubr.f32.gmra.mxu0 %v247
        %v376 = vpop.f32.mrf.mxu0
        %v377 = vadd.f32 %v219, %v376
        %v378 = vpop.f32.mrf.mxu0
        %379 = vmatprep.mubr.f32.mxu0 0.0
        %380 = vmatmul.mubr.f32.gmra.mxu0 %v250
        %v381 = vpop.f32.mrf.mxu0
        %v382 = vadd.f32 %v219, %v381
        %v383 = vpop.f32.mrf.mxu0
        %384 = vmatprep.mubr.f32.mxu0 0.0
        %385 = vmatmul.mubr.f32.gmra.mxu0 %v253
        %v386 = vpop.f32.mrf.mxu0
        %v387 = vadd.f32 %v219, %v386
        %v388 = vpop.f32.mrf.mxu0
        %389 = vmatprep.mubr.f32.mxu0 0.0
        %390 = vmatmul.mubr.f32.gmra.mxu0 %v256
        %v391 = vpop.f32.mrf.mxu0
        %v392 = vadd.f32 %v219, %v391
        %v393 = vpop.f32.mrf.mxu0
        %394 = vmatprep.mubr.f32.mxu0 0.0
        %395 = vmatmul.mubr.f32.gmra.mxu0 %v259
        %v396 = vpop.f32.mrf.mxu0
        %v397 = vadd.f32 %v219, %v396
        %v398 = vpop.f32.mrf.mxu0
        %399 = vmatprep.mubr.f32.mxu0 0.0
        %400 = vmatmul.mubr.f32.gmra.mxu0 %v262
        %v401 = vpop.f32.mrf.mxu0
        %v402 = vadd.f32 %v219, %v401
        %v403 = vpop.f32.mrf.mxu0
        %404 = vmatprep.mubr.f32.mxu0 0.0
        %405 = vmatmul.mubr.f32.gmra.mxu0 %v265
        %v406 = vpop.f32.mrf.mxu0
        %v407 = vadd.f32 %v219, %v406
        %v408 = vpop.f32.mrf.mxu0
        %409 = vmatprep.mubr.f32.mxu0 0.0
        %410 = vmatmul.mubr.f32.gmra.mxu0 %v268
        %v411 = vpop.f32.mrf.mxu0
        %v412 = vadd.f32 %v219, %v411
        %v413 = vpop.f32.mrf.mxu0
        %414 = vdwg.mxu0
        %v415 = vmax.f32 %v337, 0.0
        %v416 = vmax.f32 %v342, 0.0
        %v417 = vmax.f32 %v347, 0.0
        %v418 = vmax.f32 %v352, 0.0
        %v419 = vmax.f32 %v357, 0.0
        %v420 = vmax.f32 %v362, 0.0
        %v421 = vmax.f32 %v367, 0.0
        %v422 = vmax.f32 %v372, 0.0
        %v423 = vmax.f32 %v377, 0.0
        %v424 = vmax.f32 %v382, 0.0
        %v425 = vmax.f32 %v387, 0.0
        %v426 = vmax.f32 %v392, 0.0
        %v427 = vmax.f32 %v397, 0.0
        %v428 = vmax.f32 %v402, 0.0
        %v429 = vmax.f32 %v407, 0.0
        %v430 = vmax.f32 %v412, 0.0
        %vm431 = vcmask 785408
        %432 = vst.msk [vmem:[%s172] sm:$0xff] %vm431, %v415
        %433 = vst.msk [vmem:[%s172 + $0x8] sm:$0xff] %vm431, %v416
        %434 = vst.msk [vmem:[%s172 + $0x10] sm:$0xff] %vm431, %v417
        %435 = vst.msk [vmem:[%s172 + $0x18] sm:$0xff] %vm431, %v418
        %436 = vst.msk [vmem:[%s172 + $0x20] sm:$0xff] %vm431, %v419
        %437 = vst.msk [vmem:[%s172 + $0x28] sm:$0xff] %vm431, %v420
        %438 = vst.msk [vmem:[%s172 + $0x30] sm:$0xff] %vm431, %v421
        %439 = vst.msk [vmem:[%s172 + $0x38] sm:$0xff] %vm431, %v422
        %440 = vst.msk [vmem:[%s172 + $0x40] sm:$0xff] %vm431, %v423
        %441 = vst.msk [vmem:[%s172 + $0x48] sm:$0xff] %vm431, %v424
        %442 = vst.msk [vmem:[%s172 + $0x50] sm:$0xff] %vm431, %v425
        %443 = vst.msk [vmem:[%s172 + $0x58] sm:$0xff] %vm431, %v426
        %444 = vst.msk [vmem:[%s172 + $0x60] sm:$0xff] %vm431, %v427
        %445 = vst.msk [vmem:[%s172 + $0x68] sm:$0xff] %vm431, %v428
        %446 = vst.msk [vmem:[%s172 + $0x70] sm:$0xff] %vm431, %v429
        %447 = vst.msk [vmem:[%s172 + $0x78] sm:$0xff] %vm431, %v430
        %s448 = sand.u32 %s90, 1
        %s449 = sand.u32 %s90, 1
        %s450 = smul.addr %s449, 128
        %s451 = scalar_lea.vmem [#allocation2], %s450
        // Predicated region
        $region33: #{tpu_custom_call.1} parent=31 // pred_check
          %p452 = pneg %p100
        $region34: #{tpu_custom_call.1} parent=31 // pred_check_branch
          %454 = sbr.rel (%p452) target = $region36
        $region35: #{tpu_custom_call.1} parent=31 // pred_region
          %s455 = smul.u32 16, %s14
          %s456 = ssub.s32 38, %s455
          %p457 = scmp.lt.s32.totalorder %s456, 16
          %s458 = scalar_select %p457, %s456, 16
          %s459 = smul.u32 128, %s458
          %p460 = scmp.ne.s32.totalorder 0, %s459
          %s461 = smul.addr %s455, 8
          %s462 = scalar_lea.vmem %s3, %s461
          // Predicated region
          $region37: #{tpu_custom_call.1} parent=35 // pred_check
            %p463 = pneg %p460
          $region38: #{tpu_custom_call.1} parent=35 // pred_check_branch
            %465 = sbr.rel (%p463) target = $region40
          $region39: #{tpu_custom_call.1} parent=35 // pred_region
            // Predicated region
            $region41: #{tpu_custom_call.1} parent=39 // pred_check
              _
            $region42: #{tpu_custom_call.1} parent=39 // pred_check_branch
              %467 = sbr.rel (0) target = $region44
            $region43: #{tpu_custom_call.1} parent=39 // pred_region
              // Predicated region
              $region63: #{tpu_custom_call.1} parent=43 // pred_check
                _
              $region64: #{tpu_custom_call.1} parent=43 // pred_check_branch
                %547 = sbr.rel (0) target = $region66
              $region65: #{tpu_custom_call.1} parent=43 // pred_region
                %s548 = sshrl.u32 %s458, 4
                // While loop
                $region67: #{tpu_custom_call.1} parent=65 // loop_pre_header
                  _
                $region68: #{tpu_custom_call.1} parent=65 // loop_header
                  %s550 = sphi 0, %s552
                  %p551 = scmp.ge.s32.totalorder %s550, %s548
                  %s555 = sphi 0, %s592
                  %s556 = sphi %s451, %s595
                  %s557 = sphi %s462, %s596
                $region69: #{tpu_custom_call.1} parent=65 // loop_header_branch
                  %554 = sbr.rel (%p551) target = $region73
                $region70: #{tpu_custom_call.1} parent=65 // loop_body
                  %v558 = vld [vmem:[%s556] sm:$0xff]
                  %559 = vst [vmem:[%s557] sm:$0xff] %v558
                  %v560 = vld [vmem:[%s556 + $0x8] sm:$0xff]
                  %561 = vst [vmem:[%s557 + $0x8] sm:$0xff] %v560
                  %v562 = vld [vmem:[%s556 + $0x10] sm:$0xff]
                  %563 = vst [vmem:[%s557 + $0x10] sm:$0xff] %v562
                  %v564 = vld [vmem:[%s556 + $0x18] sm:$0xff]
                  %565 = vst [vmem:[%s557 + $0x18] sm:$0xff] %v564
                  %v566 = vld [vmem:[%s556 + $0x20] sm:$0xff]
                  %567 = vst [vmem:[%s557 + $0x20] sm:$0xff] %v566
                  %v568 = vld [vmem:[%s556 + $0x28] sm:$0xff]
                  %569 = vst [vmem:[%s557 + $0x28] sm:$0xff] %v568
                  %v570 = vld [vmem:[%s556 + $0x30] sm:$0xff]
                  %571 = vst [vmem:[%s557 + $0x30] sm:$0xff] %v570
                  %v572 = vld [vmem:[%s556 + $0x38] sm:$0xff]
                  %573 = vst [vmem:[%s557 + $0x38] sm:$0xff] %v572
                  %v574 = vld [vmem:[%s556 + $0x40] sm:$0xff]
                  %575 = vst [vmem:[%s557 + $0x40] sm:$0xff] %v574
                  %v576 = vld [vmem:[%s556 + $0x48] sm:$0xff]
                  %577 = vst [vmem:[%s557 + $0x48] sm:$0xff] %v576
                  %v578 = vld [vmem:[%s556 + $0x50] sm:$0xff]
                  %579 = vst [vmem:[%s557 + $0x50] sm:$0xff] %v578
                  %v580 = vld [vmem:[%s556 + $0x58] sm:$0xff]
                  %581 = vst [vmem:[%s557 + $0x58] sm:$0xff] %v580
                  %v582 = vld [vmem:[%s556 + $0x60] sm:$0xff]
                  %583 = vst [vmem:[%s557 + $0x60] sm:$0xff] %v582
                  %v584 = vld [vmem:[%s556 + $0x68] sm:$0xff]
                  %585 = vst [vmem:[%s557 + $0x68] sm:$0xff] %v584
                  %v586 = vld [vmem:[%s556 + $0x70] sm:$0xff]
                  %587 = vst [vmem:[%s557 + $0x70] sm:$0xff] %v586
                  %v588 = vld [vmem:[%s556 + $0x78] sm:$0xff]
                  %589 = vst [vmem:[%s557 + $0x78] sm:$0xff] %v588
                  %s590 = sadd.s32 1, %s555
                  %p591 = scmp.ge.s32.totalorder %s590, %s548
                  %s592 = scalar_select %p591, 0, %s590
                  %s593 = smul.u32 %s592, 128
                  %s594 = smul.u32 %s592, 128
                  %s595 = scalar_lea.vmem %s451, %s593 [#allocation2]
                  %s596 = scalar_lea.vmem %s462, %s594
                $region71: #{tpu_custom_call.1} parent=65 // loop_footer
                  %s552 = sadd.s32 %s550, 1
                $region72: #{tpu_custom_call.1} parent=65 // loop_footer_branch
                  %549 = sbr.rel target = $region68
                $region73: #{tpu_custom_call.1} parent=65 // loop_exit
                  _
                %s597 = sshrl.u32 %s458, 4
                %s598 = sand.u32 %s458, 15
                %s599 = smul.u32 %s597, 16
                %s600 = smul.u32 8, %s599
                %s601 = scalar_lea.vmem %s451, %s600 [#allocation2]
                %s602 = smul.u32 8, %s599
                %s603 = scalar_lea.vmem %s462, %s602
                // While loop
                $region74: #{tpu_custom_call.1} parent=65 // loop_pre_header
                  _
                $region75: #{tpu_custom_call.1} parent=65 // loop_header
                  %s605 = sphi 0, %s607
                  %p606 = scmp.ge.s32.totalorder %s605, %s598
                  %s610 = sphi 0, %s617
                  %s611 = sphi %s601, %s620
                  %s612 = sphi %s603, %s621
                $region76: #{tpu_custom_call.1} parent=65 // loop_header_branch
                  %609 = sbr.rel (%p606) target = $region80
                $region77: #{tpu_custom_call.1} parent=65 // loop_body
                  %v613 = vld [vmem:[%s611] sm:$0xff]
                  %614 = vst [vmem:[%s612] sm:$0xff] %v613
                  %s615 = sadd.s32 1, %s610
                  %p616 = scmp.ge.s32.totalorder %s615, %s598
                  %s617 = scalar_select %p616, 0, %s615
                  %s618 = smul.u32 %s617, 8
                  %s619 = smul.u32 %s617, 8
                  %s620 = scalar_lea.vmem %s601, %s618 [#allocation2]
                  %s621 = scalar_lea.vmem %s603, %s619
                $region78: #{tpu_custom_call.1} parent=65 // loop_footer
                  %s607 = sadd.s32 %s605, 1
                $region79: #{tpu_custom_call.1} parent=65 // loop_footer_branch
                  %604 = sbr.rel target = $region75
                $region80: #{tpu_custom_call.1} parent=65 // loop_exit
                  _
              $region66: #{tpu_custom_call.1} parent=43 // pred_fallthru
                _
              // Predicated region
              $region81: #{tpu_custom_call.1} parent=43 // pred_check
                _
              $region82: #{tpu_custom_call.1} parent=43 // pred_check_branch
                %623 = sbr.rel target = $region84
              $region83: #{tpu_custom_call.1} parent=43 // pred_region
                _
              $region84: #{tpu_custom_call.1} parent=43 // pred_fallthru
                _
            $region44: #{tpu_custom_call.1} parent=39 // pred_fallthru
              _
            // Predicated region
            $region45: #{tpu_custom_call.1} parent=39 // pred_check
              _
            $region46: #{tpu_custom_call.1} parent=39 // pred_check_branch
              %469 = sbr.rel target = $region48
            $region47: #{tpu_custom_call.1} parent=39 // pred_region
              %s471 = ssub.s32 256, 1
              %s472 = sshrl.u32 %s458, 4
              // While loop
              $region49: #{tpu_custom_call.1} parent=47 // loop_pre_header
                _
              $region50: #{tpu_custom_call.1} parent=47 // loop_header
                %s474 = sphi 0, %s476
                %p475 = scmp.ge.s32.totalorder %s474, %s472
                %s479 = sphi 0, %s516
                %s480 = sphi %s451, %s519
                %s481 = sphi %s462, %s520
              $region51: #{tpu_custom_call.1} parent=47 // loop_header_branch
                %478 = sbr.rel (%p475) target = $region55
              $region52: #{tpu_custom_call.1} parent=47 // loop_body
                %v482 = vld [vmem:[%s480] sm:%s471]
                %483 = vst [vmem:[%s481] sm:%s471] %v482
                %v484 = vld [vmem:[%s480 + $0x8] sm:%s471]
                %485 = vst [vmem:[%s481 + $0x8] sm:%s471] %v484
                %v486 = vld [vmem:[%s480 + $0x10] sm:%s471]
                %487 = vst [vmem:[%s481 + $0x10] sm:%s471] %v486
                %v488 = vld [vmem:[%s480 + $0x18] sm:%s471]
                %489 = vst [vmem:[%s481 + $0x18] sm:%s471] %v488
                %v490 = vld [vmem:[%s480 + $0x20] sm:%s471]
                %491 = vst [vmem:[%s481 + $0x20] sm:%s471] %v490
                %v492 = vld [vmem:[%s480 + $0x28] sm:%s471]
                %493 = vst [vmem:[%s481 + $0x28] sm:%s471] %v492
                %v494 = vld [vmem:[%s480 + $0x30] sm:%s471]
                %495 = vst [vmem:[%s481 + $0x30] sm:%s471] %v494
                %v496 = vld [vmem:[%s480 + $0x38] sm:%s471]
                %497 = vst [vmem:[%s481 + $0x38] sm:%s471] %v496
                %v498 = vld [vmem:[%s480 + $0x40] sm:%s471]
                %499 = vst [vmem:[%s481 + $0x40] sm:%s471] %v498
                %v500 = vld [vmem:[%s480 + $0x48] sm:%s471]
                %501 = vst [vmem:[%s481 + $0x48] sm:%s471] %v500
                %v502 = vld [vmem:[%s480 + $0x50] sm:%s471]
                %503 = vst [vmem:[%s481 + $0x50] sm:%s471] %v502
                %v504 = vld [vmem:[%s480 + $0x58] sm:%s471]
                %505 = vst [vmem:[%s481 + $0x58] sm:%s471] %v504
                %v506 = vld [vmem:[%s480 + $0x60] sm:%s471]
                %507 = vst [vmem:[%s481 + $0x60] sm:%s471] %v506
                %v508 = vld [vmem:[%s480 + $0x68] sm:%s471]
                %509 = vst [vmem:[%s481 + $0x68] sm:%s471] %v508
                %v510 = vld [vmem:[%s480 + $0x70] sm:%s471]
                %511 = vst [vmem:[%s481 + $0x70] sm:%s471] %v510
                %v512 = vld [vmem:[%s480 + $0x78] sm:%s471]
                %513 = vst [vmem:[%s481 + $0x78] sm:%s471] %v512
                %s514 = sadd.s32 1, %s479
                %p515 = scmp.ge.s32.totalorder %s514, %s472
                %s516 = scalar_select %p515, 0, %s514
                %s517 = smul.u32 %s516, 128
                %s518 = smul.u32 %s516, 128
                %s519 = scalar_lea.vmem %s451, %s517 [#allocation2]
                %s520 = scalar_lea.vmem %s462, %s518
              $region53: #{tpu_custom_call.1} parent=47 // loop_footer
                %s476 = sadd.s32 %s474, 1
              $region54: #{tpu_custom_call.1} parent=47 // loop_footer_branch
                %473 = sbr.rel target = $region50
              $region55: #{tpu_custom_call.1} parent=47 // loop_exit
                _
              %s521 = sshrl.u32 %s458, 4
              %s522 = sand.u32 %s458, 15
              %s523 = smul.u32 %s521, 16
              %s524 = smul.u32 8, %s523
              %s525 = scalar_lea.vmem %s451, %s524 [#allocation2]
              %s526 = smul.u32 8, %s523
              %s527 = scalar_lea.vmem %s462, %s526
              // While loop
              $region56: #{tpu_custom_call.1} parent=47 // loop_pre_header
                _
              $region57: #{tpu_custom_call.1} parent=47 // loop_header
                %s529 = sphi 0, %s531
                %p530 = scmp.ge.s32.totalorder %s529, %s522
                %s534 = sphi 0, %s541
                %s535 = sphi %s525, %s544
                %s536 = sphi %s527, %s545
              $region58: #{tpu_custom_call.1} parent=47 // loop_header_branch
                %533 = sbr.rel (%p530) target = $region62
              $region59: #{tpu_custom_call.1} parent=47 // loop_body
                %v537 = vld [vmem:[%s535] sm:%s471]
                %538 = vst [vmem:[%s536] sm:%s471] %v537
                %s539 = sadd.s32 1, %s534
                %p540 = scmp.ge.s32.totalorder %s539, %s522
                %s541 = scalar_select %p540, 0, %s539
                %s542 = smul.u32 %s541, 8
                %s543 = smul.u32 %s541, 8
                %s544 = scalar_lea.vmem %s525, %s542 [#allocation2]
                %s545 = scalar_lea.vmem %s527, %s543
              $region60: #{tpu_custom_call.1} parent=47 // loop_footer
                %s531 = sadd.s32 %s529, 1
              $region61: #{tpu_custom_call.1} parent=47 // loop_footer_branch
                %528 = sbr.rel target = $region57
              $region62: #{tpu_custom_call.1} parent=47 // loop_exit
                _
            $region48: #{tpu_custom_call.1} parent=39 // pred_fallthru
              _
          $region40: #{tpu_custom_call.1} parent=35 // pred_fallthru
            _
          %624 = vnop
        $region36: #{tpu_custom_call.1} parent=31 // pred_fallthru
          _
      $region32: #{tpu_custom_call.1} parent=5 // pred_fallthru
        _
      %p625 = scmp.le.s32.totalorder 2, %s9
      // Predicated region
      $region85: #{tpu_custom_call.1} parent=5 // pred_check
        %p626 = pneg %p625
      $region86: #{tpu_custom_call.1} parent=5 // pred_check_branch
        %628 = sbr.rel (%p626) target = $region88
      $region87: #{tpu_custom_call.1} parent=5 // pred_region
        %s629 = ssub.s32 %s9, 2
        // Predicated region
        $region89: #{tpu_custom_call.1} parent=87 // pred_check
          %p630 = pneg %p106
        $region90: #{tpu_custom_call.1} parent=87 // pred_check_branch
          %632 = sbr.rel (%p630) target = $region92
        $region91: #{tpu_custom_call.1} parent=87 // pred_region
          %s633 = sand.u32 %s91, 1
          %s634 = sand.u32 %s91, 1
          %s635 = smul.addr %s634, 128
          %s636 = scalar_lea.vmem [#allocation2], %s635
        $region92: #{tpu_custom_call.1} parent=87 // pred_fallthru
          _
      $region88: #{tpu_custom_call.1} parent=5 // pred_fallthru
        _
    $region6: #{tpu_custom_call.1} parent=1 // loop_footer
      %s13 = sadd.s32 1, %s9
    $region7: #{tpu_custom_call.1} parent=1 // loop_footer_branch
      %8 = sbr.rel target = $region3
    $region8: #{tpu_custom_call.1} parent=1 // loop_exit
      _

</llo_original>
